<compile_context>
chip_gen: v6e
topology: v6e:2x2x1
jax: 0.10.0
libtpu: 0.0.40
codegen_flags: <defaults>
</compile_context>

<pallas_src>
import numpy as np
import jax
import jax.numpy as jnp
from jax.experimental import pallas as pl
from jax.experimental.pallas import tpu as pltpu


IN_FEATURES = 16
OUT_FEATURES = 8
BATCH = 2
HIDDEN = 48        # linear1 output width (3*4*4)
HIDDEN_PAD = 128   # zero-padded hidden width (lane-dense)
TILE_CAP = 2048    # max batch-tile rows (tunable; review suggested 1024-4096)


def _conv_as_matrix(w_conv: np.ndarray) -> np.ndarray:
    """Conv2d(3->1, kernel=4, stride=2, padding=1) on a 4x4 map == (48, 4) matrix.

    Row index = c*16 + ih*4 + iw  (NCHW row-major flattening of the 3x4x4 input,
                                   matching torch .view(-1, 3, 4, 4))
    Col index = oh*2 + ow         (row-major flattening of the 1x2x2 output,
                                   matching torch .view(-1, 4))
    """
    M = np.zeros((3 * 4 * 4, 2 * 2), dtype=np.float32)
    for c in range(3):
        for kh in range(4):
            for kw in range(4):
                for oh in range(2):
                    for ow in range(2):
                        ih = oh * 2 - 1 + kh  # padding = 1, stride = 2
                        iw = ow * 2 - 1 + kw
                        if 0 <= ih < 4 and 0 <= iw < 4:
                            M[c * 16 + ih * 4 + iw, oh * 2 + ow] += w_conv[0, c, kh, kw]
    return M


def prepare_params(w1, w_conv, b_conv, w2, compute_dtype=jnp.bfloat16):
    """One-time parameter preprocessing.

    Returns:
      w1t     : (in_features, 128)  linear1 weight, transposed, hidden zero-padded, bf16
      fused_w : (128, out_features) conv-as-matrix fused with linear2, hidden padded, bf16
      fused_b : (1, out_features)   conv bias pushed through linear2, f32
    """
    w1_np = np.asarray(w1, dtype=np.float32)              # (48, in)
    w2_np = np.asarray(w2, dtype=np.float32)              # (out, 4)
    cm = _conv_as_matrix(np.asarray(w_conv, dtype=np.float32))   # (48, 4)
    fused = cm @ w2_np.T                                   # (48, out)
    fused_b = (np.asarray(b_conv, dtype=np.float32)[0]
               * w2_np.sum(axis=1)).reshape(1, -1)         # (1, out)

    in_f = w1_np.shape[1]
    out_f = w2_np.shape[0]
    # Zero-pad hidden 48 -> 128: free in MXU cycles, makes h lane-dense.
    # Valid only because linear1 has no bias (tanh(0) = 0 keeps padding zero).
    w1t_pad = np.zeros((in_f, HIDDEN_PAD), dtype=np.float32)
    w1t_pad[:, :HIDDEN] = w1_np.T
    fw_pad = np.zeros((HIDDEN_PAD, out_f), dtype=np.float32)
    fw_pad[:HIDDEN, :] = fused

    return (jnp.asarray(w1t_pad, dtype=compute_dtype),
            jnp.asarray(fw_pad, dtype=compute_dtype),
            jnp.asarray(fused_b, dtype=jnp.float32))


def _kernel(x_ref, w1t_ref, fw_ref, fb_ref, o_ref):
    # linear1 (no bias), bf16 MXU matmul with f32 accumulation, tanh in f32
    h = jnp.tanh(jnp.dot(x_ref[...], w1t_ref[...],
                         preferred_element_type=jnp.float32))
    # fused (conv-as-matrix @ linear2): bf16 MXU path, f32 accumulation
    h = h.astype(fw_ref.dtype)
    y = jnp.dot(h, fw_ref[...], preferred_element_type=jnp.float32) + fb_ref[...]
    o_ref[...] = jnp.tanh(y).astype(o_ref.dtype)


def _pick_batch_tile(B: int, tile_cap: int) -> int:
    """Batch tile: big enough to amortize per-step overhead, but always >= 2
    grid steps once B > 256 so v7x's two TensorCores both run."""
    if B <= 256:
        return B
    half = -(-B // 2)                       # cdiv(B, 2)
    return min(tile_cap, ((half + 7) // 8) * 8)


def linear_with_conv2d_forward(x, w1t, fused_w, fused_b, *, tile_cap=TILE_CAP):
    """x: (B, in_features). Params are the outputs of prepare_params."""
    B, in_f = x.shape
    hid = w1t.shape[1]              # 128
    out_f = fused_w.shape[1]        # out_features

    # bf16 input halves HBM read traffic; for peak perf upstream should already
    # supply bf16 so this convert is a no-op.
    x = x.astype(w1t.dtype)

    tile_b = _pick_batch_tile(B, tile_cap)
    grid_b = pl.cdiv(B, tile_b)
    b_pad = grid_b * tile_b
    if b_pad != B:                  # remainder handling: pad, never one huge block
        x = jnp.pad(x, ((0, b_pad - B), (0, 0)))

    out = pl.pallas_call(
        _kernel,
        out_shape=jax.ShapeDtypeStruct((b_pad, out_f), jnp.float32),
        grid=(grid_b,),
        in_specs=[
            pl.BlockSpec((tile_b, in_f), lambda i: (i, 0)),   # x tile (bf16)
            pl.BlockSpec((in_f, hid),    lambda i: (0, 0)),   # w1^T (resident)
            pl.BlockSpec((hid, out_f),   lambda i: (0, 0)),   # fused conv+linear2
            pl.BlockSpec((1, out_f),     lambda i: (0, 0)),   # fused bias (VMEM)
        ],
        out_specs=pl.BlockSpec((tile_b, out_f), lambda i: (i, 0)),
        compiler_params=pltpu.CompilerParams(
            dimension_semantics=("parallel",)),
    )(x, w1t, fused_w, fused_b)

    if b_pad != B:
        out = out[:B]
    return out


def _reference(x, w1, w_conv, b_conv, w2):
    """Pure-JAX f32 reference mirroring the PyTorch forward (NCHW conv)."""
    h = jnp.tanh(x @ w1.T)                       # (B, 48)
    img = h.reshape(-1, 3, 4, 4)                 # NCHW, as in torch .view
    y = jax.lax.conv_general_dilated(
        img, w_conv, window_strides=(2, 2), padding=((1, 1), (1, 1)),
        dimension_numbers=("NCHW", "OIHW", "NCHW"))
    y = y + b_conv.reshape(1, 1, 1, 1)           # (B, 1, 2, 2)
    y = y.reshape(-1, 4)
    return jnp.tanh(y @ w2.T)


if __name__ == "__main__":
    key = jax.random.PRNGKey(0)
    kx, kx2, k1, kc, kb, k2 = jax.random.split(key, 6)

    # deterministic inputs + PyTorch-style uniform parameter init
    x = jax.random.normal(kx, (BATCH, IN_FEATURES), dtype=jnp.float32)
    w1 = jax.random.uniform(k1, (HIDDEN, IN_FEATURES), jnp.float32,
                            -1.0 / np.sqrt(IN_FEATURES), 1.0 / np.sqrt(IN_FEATURES))
    fan_in = 3 * 4 * 4
    w_conv = jax.random.uniform(kc, (1, 3, 4, 4), jnp.float32,
                                -1.0 / np.sqrt(fan_in), 1.0 / np.sqrt(fan_in))
    b_conv = jax.random.uniform(kb, (1,), jnp.float32,
                                -1.0 / np.sqrt(fan_in), 1.0 / np.sqrt(fan_in))
    w2 = jax.random.uniform(k2, (OUT_FEATURES, 4), jnp.float32, -0.5, 0.5)

    # Parameter preprocessing happens exactly once, outside the forward path.
    w1t, fused_w, fused_b = prepare_params(w1, w_conv, b_conv, w2)
    fwd = jax.jit(linear_with_conv2d_forward)

    # --- required small-batch case (B=2) ---
    out = jax.block_until_ready(fwd(x, w1t, fused_w, fused_b))
    ref = jax.block_until_ready(_reference(x, w1, w_conv, b_conv, w2))
    assert out.shape == (BATCH, OUT_FEATURES)
    np.testing.assert_allclose(np.asarray(out), np.asarray(ref),
                               rtol=2e-2, atol=2e-2)   # bf16 inputs vs f32 ref

    # --- larger, non-divisible batch: exercises >=2 "parallel" grid steps
    #     (v7x megacore) and the wrapper-side padding/slicing path ---
    B2 = 600
    x2 = jax.random.normal(kx2, (B2, IN_FEATURES), dtype=jnp.float32)
    out2 = jax.block_until_ready(fwd(x2, w1t, fused_w, fused_b))
    ref2 = jax.block_until_ready(_reference(x2, w1, w_conv, b_conv, w2))
    assert out2.shape == (B2, OUT_FEATURES)
    np.testing.assert_allclose(np.asarray(out2), np.asarray(ref2),
                               rtol=2e-2, atol=2e-2)

    print("KERNEL_OK")
</pallas_src>

<mosaic_0001>
module attributes {stable_mosaic.version = 11 : i64} {
  func.func @_kernel(%arg0: i32, %arg1: memref<2x16xbf16, #tpu.memory_space<vmem>>, %arg2: memref<16x128xbf16, #tpu.memory_space<vmem>>, %arg3: memref<128x8xbf16, #tpu.memory_space<vmem>>, %arg4: memref<1x8xf32, #tpu.memory_space<vmem>>, %arg5: memref<2x8xf32, #tpu.memory_space<vmem>>) attributes {dimension_semantics = [#tpu.dimension_semantics<parallel>], iteration_bounds = array<i64: 1>, scalar_prefetch = 0 : i64, scratch_operands = 0 : i64, tpu.core_type = #tpu.core_type<tc>, window_params = [{transform_indices = @transform_0, window_bounds = array<i64: 2, 16>}, {pipeline_mode = #tpu.pipeline_mode<synchronous>, transform_indices = @transform_1, window_bounds = array<i64: 16, 128>}, {pipeline_mode = #tpu.pipeline_mode<synchronous>, transform_indices = @transform_2, window_bounds = array<i64: 128, 8>}, {pipeline_mode = #tpu.pipeline_mode<synchronous>, transform_indices = @transform_3, window_bounds = array<i64: 1, 8>}, {transform_indices = @transform_4, window_bounds = array<i64: 2, 8>}]} {
    %c0 = arith.constant 0 : index
    %c0_0 = arith.constant 0 : index
    %0 = vector.load %arg1[%c0, %c0_0] : memref<2x16xbf16, #tpu.memory_space<vmem>>, vector<2x16xbf16>
    %c0_1 = arith.constant 0 : index
    %c0_2 = arith.constant 0 : index
    %1 = vector.load %arg2[%c0_1, %c0_2] : memref<16x128xbf16, #tpu.memory_space<vmem>>, vector<16x128xbf16>
    %cst = arith.constant dense<0.000000e+00> : vector<2x128xf32>
    %2 = tpu.matmul %0, %1, %cst {dimension_numbers = #tpu.dot_dimension_numbers<[1], [0], [0], [1], [0, 0, 1, 1], [], []>} : vector<2x16xbf16>, vector<16x128xbf16>, vector<2x128xf32> -> vector<2x128xf32>
    %3 = math.tanh %2 : vector<2x128xf32>
    %4 = arith.truncf %3 : vector<2x128xf32> to vector<2x128xbf16>
    %c0_3 = arith.constant 0 : index
    %c0_4 = arith.constant 0 : index
    %5 = vector.load %arg3[%c0_3, %c0_4] : memref<128x8xbf16, #tpu.memory_space<vmem>>, vector<128x8xbf16>
    %cst_5 = arith.constant dense<0.000000e+00> : vector<2x8xf32>
    %6 = tpu.matmul %4, %5, %cst_5 {dimension_numbers = #tpu.dot_dimension_numbers<[1], [0], [0], [1], [0, 0, 1, 1], [], []>} : vector<2x128xbf16>, vector<128x8xbf16>, vector<2x8xf32> -> vector<2x8xf32>
    %c0_6 = arith.constant 0 : index
    %c0_7 = arith.constant 0 : index
    %7 = vector.load %arg4[%c0_6, %c0_7] : memref<1x8xf32, #tpu.memory_space<vmem>>, vector<1x8xf32>
    %8 = vector.broadcast %7 : vector<1x8xf32> to vector<2x8xf32>
    %9 = arith.addf %6, %8 : vector<2x8xf32>
    %10 = math.tanh %9 : vector<2x8xf32>
    %c0_8 = arith.constant 0 : index
    %c0_9 = arith.constant 0 : index
    %11 = vector.load %arg5[%c0_8, %c0_9] : memref<2x8xf32, #tpu.memory_space<vmem>>, vector<2x8xf32>
    tpu.vector_store %arg5[%c0_8, %c0_9], %10 {strides = array<i32>} : memref<2x8xf32, #tpu.memory_space<vmem>>, vector<2x8xf32>,
    return
  }
  func.func @transform_0(%arg0: i32) -> (i32, i32) {
    %c0_i32 = arith.constant 0 : i32
    %c0_i32_0 = arith.constant 0 : i32
    return %arg0, %c0_i32 : i32, i32
  }
  func.func @transform_1(%arg0: i32) -> (i32, i32) {
    %c0_i32 = arith.constant 0 : i32
    %c0_i32_0 = arith.constant 0 : i32
    %c0_i32_1 = arith.constant 0 : i32
    return %c0_i32, %c0_i32_0 : i32, i32
  }
  func.func @transform_2(%arg0: i32) -> (i32, i32) {
    %c0_i32 = arith.constant 0 : i32
    %c0_i32_0 = arith.constant 0 : i32
    %c0_i32_1 = arith.constant 0 : i32
    return %c0_i32, %c0_i32_0 : i32, i32
  }
  func.func @transform_3(%arg0: i32) -> (i32, i32) {
    %c0_i32 = arith.constant 0 : i32
    %c0_i32_0 = arith.constant 0 : i32
    %c0_i32_1 = arith.constant 0 : i32
    return %c0_i32, %c0_i32_0 : i32, i32
  }
  func.func @transform_4(%arg0: i32) -> (i32, i32) {
    %c0_i32 = arith.constant 0 : i32
    %c0_i32_0 = arith.constant 0 : i32
    return %arg0, %c0_i32 : i32, i32
  }
}

</mosaic_0001>

<llo_original>
// kernel: linear_with_conv2d_forward.1
$region0: #{linear_with_conv2d_forward.1}
  #allocation0 [shape = 'u32[]', space=smem, size = 0x4, offset = 0x4, fixed_abs, tag = 'smem constant byte address 0x4 - core index']
  #allocation1 [shape = 'u32[144,128]{1,0:T(1,128)}', space=vmem, size = 0x12000, scoped, tag = 'internal scratch']
  %s0 = inlined_call_operand.vmem [shape: bf16[2,16], index: 0, kind: input, shape index: {}]
  %s1 = inlined_call_operand.vmem [shape: bf16[16,128], index: 1, kind: input, shape index: {}]
  %s2 = inlined_call_operand.vmem [shape: bf16[128,8], index: 2, kind: input, shape index: {}]
  %s3 = inlined_call_operand.vmem [shape: f32[1,8], index: 3, kind: input, shape index: {}]
  %s4 = inlined_call_operand.hbm [shape: f32[2,8], index: 4, kind: output, shape index: {}]
  %s5 = sld [smem:[#allocation0]]
  $region26: #{linear_with_conv2d_forward.1} parent=0
    _
  %s7 = ssub.s32 1, %s5
  %s8 = scalar_select 0, %s7, %s5
  $region1: #{linear_with_conv2d_forward.1} parent=0
    #allocation2 [shape = 'u8[1024]{0}', space=vmem, size = 0x400, scoped, tag = 'output window, operand 0, single buffered']
    #allocation3 [shape = 's32[1]{0}', space=sflag, size = 0x4, scoped, tag = 'scoped memory for linear_with_conv2d_forward.1']
    %9 = vsyncpa [#allocation3], 0
    // Predicated region
    $region2: #{linear_with_conv2d_forward.1} parent=1 // pred_check
      _
    $region3: #{linear_with_conv2d_forward.1} parent=1 // pred_check_branch
      %11 = sbr.rel (0) target = $region5
    $region4: #{linear_with_conv2d_forward.1} parent=1 // pred_region
      _
    $region5: #{linear_with_conv2d_forward.1} parent=1 // pred_fallthru
      _
    // Predicated region
    $region6: #{linear_with_conv2d_forward.1} parent=1 // pred_check
      _
    $region7: #{linear_with_conv2d_forward.1} parent=1 // pred_check_branch
      %13 = sbr.rel (0) target = $region9
    $region8: #{linear_with_conv2d_forward.1} parent=1 // pred_region
      _
    $region9: #{linear_with_conv2d_forward.1} parent=1 // pred_fallthru
      _
    // Predicated region
    $region10: #{linear_with_conv2d_forward.1} parent=1 // pred_check
      _
    $region11: #{linear_with_conv2d_forward.1} parent=1 // pred_check_branch
      %15 = sbr.rel (0) target = $region13
    $region12: #{linear_with_conv2d_forward.1} parent=1 // pred_region
      _
    $region13: #{linear_with_conv2d_forward.1} parent=1 // pred_fallthru
      _
    // Predicated region
    $region14: #{linear_with_conv2d_forward.1} parent=1 // pred_check
      _
    $region15: #{linear_with_conv2d_forward.1} parent=1 // pred_check_branch
      %17 = sbr.rel (0) target = $region17
    $region16: #{linear_with_conv2d_forward.1} parent=1 // pred_region
      _
    $region17: #{linear_with_conv2d_forward.1} parent=1 // pred_fallthru
      _
    %v19 = vld [vmem:[%s0] sm:$0x1]
    %v20 = vld [vmem:[%s1] sm:$0xf]
    %v21 = vld [vmem:[%s1 + $0x4] sm:$0xf]
    %v24 = vunpack.c.l.b16 %v20
    %v25 = vunpack.c.l.b16 %v21
    %v26 = vpack.c.b16 %v25, %v24
    %vm28 = vcmask 130048
    %v30 = vsel %vm28, %v19, 0
    %32 = vmatprep.subr.bf16.mxu0 0
    %33 = vmatpush1.bf16.msra.mxu0 0
    %34 = vmatprep.subr.bf16.mxu0 0
    %35 = vmatpush1.bf16.msra.mxu0 0
    %36 = vmatprep.subr.bf16.mxu0 0
    %37 = vmatpush1.bf16.msra.mxu0 0
    %38 = vmatprep.subr.bf16.mxu0 0
    %39 = vmatpush1.bf16.msra.mxu0 0
    %40 = vmatprep.subr.bf16.mxu0 0
    %41 = vmatpush1.bf16.msra.mxu0 0
    %42 = vmatprep.subr.bf16.mxu0 0
    %43 = vmatpush1.bf16.msra.mxu0 0
    %44 = vmatprep.subr.bf16.mxu0 0
    %45 = vmatpush1.bf16.msra.mxu0 0
    %46 = vmatprep.subr.bf16.mxu0 0
    %47 = vmatpush1.bf16.msra.mxu0 %v26
    %48 = vmatprep.subr.bf16.mxu0 0
    %49 = vmatpush2.bf16.msra.mxu0 0
    %50 = vmatprep.subr.bf16.mxu0 0
    %51 = vmatpush2.bf16.msra.mxu0 0
    %52 = vmatprep.subr.bf16.mxu0 0
    %53 = vmatpush2.bf16.msra.mxu0 0
    %54 = vmatprep.subr.bf16.mxu0 0
    %55 = vmatpush2.bf16.msra.mxu0 0
    %56 = vmatprep.subr.bf16.mxu0 0
    %57 = vmatpush2.bf16.msra.mxu0 0
    %58 = vmatprep.subr.bf16.mxu0 0
    %59 = vmatpush2.bf16.msra.mxu0 0
    %60 = vmatprep.subr.bf16.mxu0 0
    %61 = vmatpush2.bf16.msra.mxu0 0
    %62 = vmatprep.subr.bf16.mxu0 0
    %63 = vmatpush2.bf16.msra.mxu0 0
    %64 = vmatprep.mubr.bf16.mxu0 0
    %65 = vmatmul.mubr.bf16.gmra.mxu0 %v30
    %v66 = vpop.f32.mrf.mxu0
    %v67 = vadd.f32 0.0, %v66
    %v68 = vpop.f32.mrf.mxu0
    %v69 = vpop.f32.mrf.mxu0
    %v70 = vpop.f32.mrf.mxu0
    %71 = vdwg.mxu0
    %v72 = vtanh.pop %v67
    %v73 = vpack.c.bf16 %v72, %v72
    %v74 = vld [vmem:[%s2] sm:$0xf]
    %v75 = vld [vmem:[%s2 + $0x4] sm:$0xf]
    %v76 = vld [vmem:[%s2 + $0x8] sm:$0xf]
    %v77 = vld [vmem:[%s2 + $0xc] sm:$0xf]
    %v78 = vld [vmem:[%s2 + $0x10] sm:$0xf]
    %v79 = vld [vmem:[%s2 + $0x14] sm:$0xf]
    %v80 = vld [vmem:[%s2 + $0x18] sm:$0xf]
    %v81 = vld [vmem:[%s2 + $0x1c] sm:$0xf]
    %v82 = vld [vmem:[%s2 + $0x20] sm:$0xf]
    %v83 = vld [vmem:[%s2 + $0x24] sm:$0xf]
    %v84 = vld [vmem:[%s2 + $0x28] sm:$0xf]
    %v85 = vld [vmem:[%s2 + $0x2c] sm:$0xf]
    %v86 = vld [vmem:[%s2 + $0x30] sm:$0xf]
    %v87 = vld [vmem:[%s2 + $0x34] sm:$0xf]
    %v88 = vld [vmem:[%s2 + $0x38] sm:$0xf]
    %v89 = vld [vmem:[%s2 + $0x3c] sm:$0xf]
    %v90 = vld [vmem:[%s3] sm:$0x1]
    %v92 = vlaneseq
    %v93 = vshrl.u32 %v92, 7
    %v94 = vsub.s32 0, %v93
    %v95 = vrot.slane %v90, %v94
    %v113 = vunpack.c.l.b16 %v74
    %v114 = vunpack.c.l.b16 %v75
    %v115 = vunpack.c.l.b16 %v76
    %v116 = vunpack.c.l.b16 %v77
    %v117 = vunpack.c.l.b16 %v78
    %v118 = vunpack.c.l.b16 %v79
    %v119 = vunpack.c.l.b16 %v80
    %v120 = vunpack.c.l.b16 %v81
    %v121 = vunpack.c.l.b16 %v82
    %v122 = vunpack.c.l.b16 %v83
    %v123 = vunpack.c.l.b16 %v84
    %v124 = vunpack.c.l.b16 %v85
    %v125 = vunpack.c.l.b16 %v86
    %v126 = vunpack.c.l.b16 %v87
    %v127 = vunpack.c.l.b16 %v88
    %v128 = vunpack.c.l.b16 %v89
    %v129 = vpack.c.b16 %v114, %v113
    %v130 = vpack.c.b16 %v116, %v115
    %v131 = vpack.c.b16 %v118, %v117
    %v132 = vpack.c.b16 %v120, %v119
    %v133 = vpack.c.b16 %v122, %v121
    %v134 = vpack.c.b16 %v124, %v123
    %v135 = vpack.c.b16 %v126, %v125
    %v136 = vpack.c.b16 %v128, %v127
    %145 = vmatprep.subr.bf16.mxu0 0
    %146 = vmatpush1.bf16.msra.mxu0 %v136
    %147 = vmatprep.subr.bf16.mxu0 0
    %148 = vmatpush1.bf16.msra.mxu0 %v135
    %149 = vmatprep.subr.bf16.mxu0 0
    %150 = vmatpush1.bf16.msra.mxu0 %v134
    %151 = vmatprep.subr.bf16.mxu0 0
    %152 = vmatpush1.bf16.msra.mxu0 %v133
    %153 = vmatprep.subr.bf16.mxu0 0
    %154 = vmatpush1.bf16.msra.mxu0 %v132
    %155 = vmatprep.subr.bf16.mxu0 0
    %156 = vmatpush1.bf16.msra.mxu0 %v131
    %157 = vmatprep.subr.bf16.mxu0 0
    %158 = vmatpush1.bf16.msra.mxu0 %v130
    %159 = vmatprep.subr.bf16.mxu0 0
    %160 = vmatpush1.bf16.msra.mxu0 %v129
    %161 = vmatprep.subr.bf16.mxu0 0
    %162 = vmatpush2.bf16.msra.mxu0 0
    %163 = vmatprep.subr.bf16.mxu0 0
    %164 = vmatpush2.bf16.msra.mxu0 0
    %165 = vmatprep.subr.bf16.mxu0 0
    %166 = vmatpush2.bf16.msra.mxu0 0
    %167 = vmatprep.subr.bf16.mxu0 0
    %168 = vmatpush2.bf16.msra.mxu0 0
    %169 = vmatprep.subr.bf16.mxu0 0
    %170 = vmatpush2.bf16.msra.mxu0 0
    %171 = vmatprep.subr.bf16.mxu0 0
    %172 = vmatpush2.bf16.msra.mxu0 0
    %173 = vmatprep.subr.bf16.mxu0 0
    %174 = vmatpush2.bf16.msra.mxu0 0
    %175 = vmatprep.subr.bf16.mxu0 0
    %176 = vmatpush2.bf16.msra.mxu0 0
    %177 = vmatprep.mubr.bf16.mxu0 0
    %178 = vmatmul.mubr.bf16.gmra.mxu0 %v73
    %v179 = vpop.f32.mrf.mxu0
    %v180 = vadd.f32 %v95, %v179
    %v181 = vpop.f32.mrf.mxu0
    %v182 = vpop.f32.mrf.mxu0
    %v183 = vpop.f32.mrf.mxu0
    %184 = vdwg.mxu0
    %v185 = vtanh.pop %v180
    %vm186 = vcmask 58368
    %187 = vst.msk [vmem:[#allocation2] sm:$0x3] %vm186, %v185
    // Predicated region
    $region18: #{linear_with_conv2d_forward.1} parent=1 // pred_check
      _
    $region19: #{linear_with_conv2d_forward.1} parent=1 // pred_check_branch
      %189 = sbr.rel (0) target = $region21
    $region20: #{linear_with_conv2d_forward.1} parent=1 // pred_region
      %s191 = ssub.s32 32, 32
      %192 = vsyncadd [#allocation3], %s191
      %s194 = sshll.u32 [#allocation2], 4
      %s195 = int_to_ptr.vmem [resolvable:$true] %s194
      %197 = dma.vmem_to_hbm [thread:$0]  %s195, 32, %s4, [#allocation3]
    $region21: #{linear_with_conv2d_forward.1} parent=1 // pred_fallthru
      _
    // Predicated region
    $region22: #{linear_with_conv2d_forward.1} parent=1 // pred_check
      _
    $region23: #{linear_with_conv2d_forward.1} parent=1 // pred_check_branch
      %199 = sbr.rel (0) target = $region25
    $region24: #{linear_with_conv2d_forward.1} parent=1 // pred_region
      %200 = dma.done [#allocation3], 32
    $region25: #{linear_with_conv2d_forward.1} parent=1 // pred_fallthru
      _
    %201 = vsyncpa [#allocation3], 1

</llo_original>
